<compile_context>
chip_gen: v6e
topology: v6e:2x2x1
jax: 0.10.0
libtpu: 0.0.40
codegen_flags: <defaults>
</compile_context>

<pallas_src>
import jax
import jax.numpy as jnp
from jax.experimental import pallas as pl
from jax.experimental.pallas import tpu as pltpu

_BN_EPS = 1e-5      # nn.BatchNorm1d default eps
_NORM_EPS = 1e-10   # normalize_A epsilon


def _make_dg_kernel(B, E, T, G, EMB, K, out_w, pool, p_out):
    """Builds the fused DGEmbedding forward kernel for static shapes."""
    GE = G * E

    def kernel(x_ref, a_ref, gamma_ref, beta_ref, w_ref, bias_ref, o_ref,
               ygx_ref, col_ref, h2_ref):
        # x_ref:     (B*T, E)        input in BatchNorm layout, rows = (batch, time)
        # a_ref:     (E, E)          adjacency parameter A
        # gamma/beta:(T, 1)          BatchNorm affine parameters (per time channel)
        # w_ref:     (K*G*E, G*EMB)  block-diagonal flattened Conv2d weights
        # bias_ref:  (1, G*EMB)      Conv2d biases
        # o_ref:     (B*p_out, EMB)  output
        # ygx_ref:   (B*T, G*E)      scratch: [x_bn | L x_bn | L^2 x_bn | ...]
        # col_ref:   (B*out_w, K*G*E) scratch: im2col for all layers
        # h2_ref:    (B*out_w, G*EMB) scratch: tanh(conv)^2 for the L2 pooling

        # ---- BatchNorm1d(time): training-mode batch statistics over (batch, electrode) ----
        # TODO(synk): running_mean/running_var buffer updates (training-side state) not modeled.
        x = x_ref[...]                                                   # (B*T, E)
        tot = x[0:T, :]
        for b in range(1, B):
            tot = tot + x[b * T:(b + 1) * T, :]
        mean = jnp.sum(tot, axis=1, keepdims=True) / float(B * E)        # (T, 1)
        var_tot = None
        for b in range(B):
            xc = x[b * T:(b + 1) * T, :] - mean
            var_tot = xc * xc if var_tot is None else var_tot + xc * xc
        var = jnp.sum(var_tot, axis=1, keepdims=True) / float(B * E)     # biased (torch-style)
        scale = gamma_ref[...] * jax.lax.rsqrt(var + _BN_EPS)            # (T, 1)
        beta = beta_ref[...]
        for b in range(B):
            ygx_ref[b * T:(b + 1) * T, 0:E] = (x[b * T:(b + 1) * T, :] - mean) * scale + beta

        # ---- normalize_A (symmetric): L = D^-1/2 (relu(A)+relu(A)^T) D^-1/2 ----
        ar = jnp.maximum(a_ref[...], 0.0)
        a_sym = ar + ar.T
        d_col = jnp.sum(a_sym, axis=1, keepdims=True)                    # (E, 1)
        d_row = jnp.sum(a_sym, axis=0, keepdims=True)                    # (1, E) == d_col.T
        lap = (a_sym * jax.lax.rsqrt(d_col + _NORM_EPS)) * jax.lax.rsqrt(d_row + _NORM_EPS)

        # ---- Chebyshev supports [L, L^2, ...] applied with ONE stacked matmul ----
        # support_0 = I was already handled by the x_bn copy above.
        if G > 1:
            sups = [lap]
            for _ in range(2, G):
                sups.append(jnp.dot(sups[-1], lap, preferred_element_type=jnp.float32))
            stack_t = jnp.concatenate([s.T for s in sups], axis=1)       # (E, (G-1)*E)
            x_bn = ygx_ref[:, 0:E]                                       # (B*T, E)
            ygx_ref[:, E:GE] = jnp.dot(x_bn, stack_t, preferred_element_type=jnp.float32)

        # ---- im2col for Conv2d(kernel=(E, K), stride=K), all layers at once ----
        # col[(b,w), (k,g,e)] = (support_g @ x_bn)[b, e, w*K + k]
        for b in range(B):
            for k in range(K):
                col_ref[b * out_w:(b + 1) * out_w, k * GE:(k + 1) * GE] = \
                    ygx_ref[pl.ds(b * T + k, out_w, stride=K), :]

        # ---- conv-as-matmul (block diagonal over g) + bias + tanh ----
        h = jnp.dot(col_ref[...], w_ref[...], preferred_element_type=jnp.float32)
        h = jnp.tanh(h + bias_ref[...])                                  # (B*out_w, G*EMB)
        h2_ref[...] = h * h

        # ---- LPPool1d(norm=2) via strided sublane adds + sum over layers + relu ----
        for b in range(B):
            acc = h2_ref[pl.ds(b * out_w, p_out, stride=pool), :]
            for q in range(1, pool):
                acc = acc + h2_ref[pl.ds(b * out_w + q, p_out, stride=pool), :]
            pooled = jnp.sqrt(acc)                                       # (p_out, G*EMB)
            res = pooled[:, 0:EMB]
            for g in range(1, G):
                res = res + pooled[:, g * EMB:(g + 1) * EMB]
            o_ref[b * p_out:(b + 1) * p_out, :] = jnp.maximum(res, 0.0)

    return kernel


def dg_embedding(x, A, conv_w, conv_b, *, pool, bn_gamma=None, bn_beta=None):
    """Pallas equivalent of DGEmbedding(num_elec, emb_dim, pool, emb_kernel, g_layers, time).forward(x)."""
    B, E, T = x.shape
    G, EMB, E_w, K = conv_w.shape
    assert E_w == E and conv_b.shape == (G, EMB)
    out_w = (T - K) // K + 1                 # Conv2d output width (stride == kernel == K)
    p_out = (out_w - pool) // pool + 1       # LPPool1d output length (stride == kernel == pool)
    assert out_w >= 1 and p_out >= 1

    if bn_gamma is None:
        bn_gamma = jnp.ones((T,), jnp.float32)   # fresh nn.BatchNorm1d: weight = 1
    if bn_beta is None:
        bn_beta = jnp.zeros((T,), jnp.float32)   # fresh nn.BatchNorm1d: bias = 0

    # ---------- wrapper-side constant layout plumbing only ----------
    # x in the BatchNorm1d layout (the module itself does x.transpose(1,2) before BN).
    x2 = jnp.transpose(x, (0, 2, 1)).reshape(B * T, E).astype(jnp.float32)
    gamma2 = jnp.reshape(bn_gamma, (T, 1)).astype(jnp.float32)
    beta2 = jnp.reshape(bn_beta, (T, 1)).astype(jnp.float32)
    # Block-diagonal flattened Conv2d weight: rows (k, g, e), cols (g', m); zero when g != g'.
    # Built elementwise (no dot) so no precision is lost at trace time.
    wt = jnp.transpose(conv_w, (3, 0, 2, 1))                             # (K, G, E, EMB)
    eye_g = jnp.eye(G, dtype=jnp.float32)
    w_bd = (wt[:, :, :, None, :] * eye_g[None, :, None, :, None]).reshape(K * G * E, G * EMB)
    bias_bd = conv_b.reshape(1, G * EMB)

    GE = G * E
    kernel = _make_dg_kernel(B, E, T, G, EMB, K, out_w, pool, p_out)
    # NOTE: for real EEG sizes (large B / long T), tile over a "parallel" batch grid
    # axis and set vmem_limit_bytes (v7x has only 64 MiB VMEM); at these shapes the
    # whole problem fits in VMEM, so a single grid=() invocation is the fastest form.
    out2d = pl.pallas_call(
        kernel,
        out_shape=jax.ShapeDtypeStruct((B * p_out, EMB), jnp.float32),
        grid=(),
        in_specs=[
            pl.BlockSpec((B * T, E), lambda: (0, 0)),
            pl.BlockSpec((E, E), lambda: (0, 0)),
            pl.BlockSpec((T, 1), lambda: (0, 0)),
            pl.BlockSpec((T, 1), lambda: (0, 0)),
            pl.BlockSpec((K * GE, G * EMB), lambda: (0, 0)),
            pl.BlockSpec((1, G * EMB), lambda: (0, 0)),
        ],
        out_specs=pl.BlockSpec((B * p_out, EMB), lambda: (0, 0)),
        scratch_shapes=[
            pltpu.VMEM((B * T, GE), jnp.float32),
            pltpu.VMEM((B * out_w, K * GE), jnp.float32),
            pltpu.VMEM((B * out_w, G * EMB), jnp.float32),
        ],
    )(x2, A.astype(jnp.float32), gamma2, beta2, w_bd, bias_bd)

    return out2d.reshape(B, p_out, EMB)


def _reference(x, A, conv_w, conv_b, pool):
    """Pure-JAX f32 mirror of the PyTorch DGEmbedding forward (fresh module, training-mode BN)."""
    hp = jax.lax.Precision.HIGHEST
    B, E, T = x.shape
    G, EMB, _, K = conv_w.shape
    mean = jnp.mean(x, axis=(0, 1), keepdims=True)
    var = jnp.mean((x - mean) ** 2, axis=(0, 1), keepdims=True)
    xn = (x - mean) / jnp.sqrt(var + _BN_EPS)

    Ar = jnp.maximum(A, 0.0)
    As = Ar + Ar.T
    d = jnp.sum(As, axis=1)
    dinv = 1.0 / jnp.sqrt(d + _NORM_EPS)
    L = dinv[:, None] * As * dinv[None, :]

    sups = [jnp.eye(E, dtype=jnp.float32)]
    for i in range(1, G):
        sups.append(L if i == 1 else jnp.matmul(sups[-1], L, precision=hp))

    out_w = (T - K) // K + 1
    p_out = (out_w - pool) // pool + 1
    res = None
    for g in range(G):
        gxg = jnp.einsum('ij,bjt->bit', sups[g], xn, precision=hp)
        gxg = gxg[:, :, :out_w * K].reshape(B, E, out_w, K)
        conv = jnp.einsum('bnwk,enk->bew', gxg, conv_w[g], precision=hp)
        conv = conv + conv_b[g][None, :, None]
        t = jnp.tanh(conv)
        t2 = (t * t)[:, :, :p_out * pool].reshape(B, EMB, p_out, pool)
        pooled = jnp.sqrt(jnp.sum(t2, axis=-1))
        og = jnp.transpose(pooled, (0, 2, 1))
        res = og if res is None else res + og
    return jnp.maximum(res, 0.0)


if __name__ == "__main__":
    num_elec, time_len = 8, 32
    emb_dim, emb_kernel, pool, g_layers = 16, 4, 2, 3
    batch = 2

    key = jax.random.PRNGKey(0)
    kx, ka, kw, kb = jax.random.split(key, 4)
    x = jax.random.normal(kx, (batch, num_elec, time_len), dtype=jnp.float32)
    # xavier_normal_-style scale for the adjacency parameter
    A = jax.random.normal(ka, (num_elec, num_elec), dtype=jnp.float32) * (2.0 / (2 * num_elec)) ** 0.5
    conv_w = jax.random.normal(kw, (g_layers, emb_dim, num_elec, emb_kernel), dtype=jnp.float32) * 0.1
    conv_b = jax.random.normal(kb, (g_layers, emb_dim), dtype=jnp.float32) * 0.1

    out = dg_embedding(x, A, conv_w, conv_b, pool=pool)
    out = jax.block_until_ready(out)

    out_w = (time_len - emb_kernel) // emb_kernel + 1
    p_out = (out_w - pool) // pool + 1
    ref = _reference(x, A, conv_w, conv_b, pool)
    assert out.shape == (batch, p_out, emb_dim)
    assert out.dtype == jnp.float32
    # Kernel matmuls run at default (single-pass bf16) MXU precision per the perf
    # review; the reference is full-f32, so compare at bf16-matmul-level tolerance.
    assert jnp.allclose(out, ref, atol=1e-2, rtol=1e-2), float(jnp.max(jnp.abs(out - ref)))

    print("KERNEL_OK")
</pallas_src>

<mosaic_0001>
module attributes {stable_mosaic.version = 11 : i64} {
  func.func @kernel(%arg0: memref<64x8xf32, #tpu.memory_space<vmem>>, %arg1: memref<8x8xf32, #tpu.memory_space<vmem>>, %arg2: memref<32x1xf32, #tpu.memory_space<vmem>>, %arg3: memref<32x1xf32, #tpu.memory_space<vmem>>, %arg4: memref<96x48xf32, #tpu.memory_space<vmem>>, %arg5: memref<1x48xf32, #tpu.memory_space<vmem>>, %arg6: memref<8x16xf32, #tpu.memory_space<vmem>>, %arg7: memref<64x24xf32, #tpu.memory_space<vmem>>, %arg8: memref<16x96xf32, #tpu.memory_space<vmem>>, %arg9: memref<16x48xf32, #tpu.memory_space<vmem>>) attributes {dimension_semantics = [], scalar_prefetch = 0 : i64, scratch_operands = 3 : i64, tpu.core_type = #tpu.core_type<tc>} {
    %c0 = arith.constant 0 : index
    %c0_0 = arith.constant 0 : index
    %0 = vector.load %arg0[%c0, %c0_0] : memref<64x8xf32, #tpu.memory_space<vmem>>, vector<64x8xf32>
    %1 = vector.extract_strided_slice %0 {offsets = [0, 0], sizes = [32, 8], strides = [1, 1]} : vector<64x8xf32> to vector<32x8xf32>
    %2 = vector.extract_strided_slice %0 {offsets = [32, 0], sizes = [32, 8], strides = [1, 1]} : vector<64x8xf32> to vector<32x8xf32>
    %3 = arith.addf %1, %2 : vector<32x8xf32>
    %cst = arith.constant dense<0.000000e+00> : vector<32xf32>
    %4 = vector.multi_reduction <add>, %3, %cst [1] : vector<32x8xf32> to vector<32xf32>
    %5 = vector.shape_cast %4 : vector<32xf32> to vector<32x1xf32>
    %cst_1 = arith.constant 1.600000e+01 : f32
    %6 = vector.broadcast %cst_1 : f32 to vector<32x1xf32>
    %7 = arith.divf %5, %6 : vector<32x1xf32>
    %8 = vector.extract_strided_slice %0 {offsets = [0, 0], sizes = [32, 8], strides = [1, 1]} : vector<64x8xf32> to vector<32x8xf32>
    %9 = vector.broadcast %7 : vector<32x1xf32> to vector<32x8xf32>
    %10 = arith.subf %8, %9 : vector<32x8xf32>
    %11 = arith.mulf %10, %10 : vector<32x8xf32>
    %12 = vector.extract_strided_slice %0 {offsets = [32, 0], sizes = [32, 8], strides = [1, 1]} : vector<64x8xf32> to vector<32x8xf32>
    %13 = vector.broadcast %7 : vector<32x1xf32> to vector<32x8xf32>
    %14 = arith.subf %12, %13 : vector<32x8xf32>
    %15 = arith.mulf %14, %14 : vector<32x8xf32>
    %16 = arith.addf %11, %15 : vector<32x8xf32>
    %cst_2 = arith.constant dense<0.000000e+00> : vector<32xf32>
    %17 = vector.multi_reduction <add>, %16, %cst_2 [1] : vector<32x8xf32> to vector<32xf32>
    %18 = vector.shape_cast %17 : vector<32xf32> to vector<32x1xf32>
    %cst_3 = arith.constant 1.600000e+01 : f32
    %19 = vector.broadcast %cst_3 : f32 to vector<32x1xf32>
    %20 = arith.divf %18, %19 : vector<32x1xf32>
    %c0_4 = arith.constant 0 : index
    %c0_5 = arith.constant 0 : index
    %21 = vector.load %arg2[%c0_4, %c0_5] : memref<32x1xf32, #tpu.memory_space<vmem>>, vector<32x1xf32>
    %cst_6 = arith.constant 9.99999974E-6 : f32
    %22 = vector.broadcast %cst_6 : f32 to vector<32x1xf32>
    %23 = arith.addf %20, %22 : vector<32x1xf32>
    %24 = math.rsqrt %23 : vector<32x1xf32>
    %25 = arith.mulf %21, %24 : vector<32x1xf32>
    %c0_7 = arith.constant 0 : index
    %c0_8 = arith.constant 0 : index
    %26 = vector.load %arg3[%c0_7, %c0_8] : memref<32x1xf32, #tpu.memory_space<vmem>>, vector<32x1xf32>
    %27 = vector.extract_strided_slice %0 {offsets = [0, 0], sizes = [32, 8], strides = [1, 1]} : vector<64x8xf32> to vector<32x8xf32>
    %28 = vector.broadcast %7 : vector<32x1xf32> to vector<32x8xf32>
    %29 = arith.subf %27, %28 : vector<32x8xf32>
    %30 = vector.broadcast %25 : vector<32x1xf32> to vector<32x8xf32>
    %31 = arith.mulf %29, %30 : vector<32x8xf32>
    %32 = vector.broadcast %26 : vector<32x1xf32> to vector<32x8xf32>
    %33 = arith.addf %31, %32 : vector<32x8xf32>
    %c0_9 = arith.constant 0 : index
    %c0_10 = arith.constant 0 : index
    %34 = vector.load %arg7[%c0_9, %c0_10] : memref<64x24xf32, #tpu.memory_space<vmem>>, vector<32x8xf32>
    tpu.vector_store %arg7[%c0_9, %c0_10], %33 {strides = array<i32>} : memref<64x24xf32, #tpu.memory_space<vmem>>, vector<32x8xf32>,
    %35 = vector.extract_strided_slice %0 {offsets = [32, 0], sizes = [32, 8], strides = [1, 1]} : vector<64x8xf32> to vector<32x8xf32>
    %36 = vector.broadcast %7 : vector<32x1xf32> to vector<32x8xf32>
    %37 = arith.subf %35, %36 : vector<32x8xf32>
    %38 = vector.broadcast %25 : vector<32x1xf32> to vector<32x8xf32>
    %39 = arith.mulf %37, %38 : vector<32x8xf32>
    %40 = vector.broadcast %26 : vector<32x1xf32> to vector<32x8xf32>
    %41 = arith.addf %39, %40 : vector<32x8xf32>
    %c32 = arith.constant 32 : index
    %c0_11 = arith.constant 0 : index
    %42 = vector.load %arg7[%c32, %c0_11] : memref<64x24xf32, #tpu.memory_space<vmem>>, vector<32x8xf32>
    tpu.vector_store %arg7[%c32, %c0_11], %41 {strides = array<i32>} : memref<64x24xf32, #tpu.memory_space<vmem>>, vector<32x8xf32>,
    %c0_12 = arith.constant 0 : index
    %c0_13 = arith.constant 0 : index
    %43 = vector.load %arg1[%c0_12, %c0_13] : memref<8x8xf32, #tpu.memory_space<vmem>>, vector<8x8xf32>
    %cst_14 = arith.constant 0.000000e+00 : f32
    %44 = vector.broadcast %cst_14 : f32 to vector<8x8xf32>
    %45 = arith.maximumf %43, %44 : vector<8x8xf32>
    %46 = tpu.transpose %45, [1, 0] : vector<8x8xf32> -> vector<8x8xf32>
    %47 = arith.addf %45, %46 : vector<8x8xf32>
    %cst_15 = arith.constant dense<0.000000e+00> : vector<8xf32>
    %48 = vector.multi_reduction <add>, %47, %cst_15 [1] : vector<8x8xf32> to vector<8xf32>
    %49 = vector.shape_cast %48 : vector<8xf32> to vector<8x1xf32>
    %cst_16 = arith.constant dense<0.000000e+00> : vector<8xf32>
    %50 = vector.multi_reduction <add>, %47, %cst_16 [0] : vector<8x8xf32> to vector<8xf32>
    %51 = vector.shape_cast %50 : vector<8xf32> to vector<1x8xf32>
    %cst_17 = arith.constant 1.000000e-10 : f32
    %52 = vector.broadcast %cst_17 : f32 to vector<8x1xf32>
    %53 = arith.addf %49, %52 : vector<8x1xf32>
    %54 = math.rsqrt %53 : vector<8x1xf32>
    %55 = vector.broadcast %54 : vector<8x1xf32> to vector<8x8xf32>
    %56 = arith.mulf %47, %55 : vector<8x8xf32>
    %cst_18 = arith.constant 1.000000e-10 : f32
    %57 = vector.broadcast %cst_18 : f32 to vector<1x8xf32>
    %58 = arith.addf %51, %57 : vector<1x8xf32>
    %59 = math.rsqrt %58 : vector<1x8xf32>
    %60 = vector.broadcast %59 : vector<1x8xf32> to vector<8x8xf32>
    %61 = arith.mulf %56, %60 : vector<8x8xf32>
    %cst_19 = arith.constant dense<0.000000e+00> : vector<8x8xf32>
    %62 = tpu.matmul %61, %61, %cst_19 {dimension_numbers = #tpu.dot_dimension_numbers<[1], [0], [0], [1], [0, 0, 1, 1], [], []>} : vector<8x8xf32>, vector<8x8xf32>, vector<8x8xf32> -> vector<8x8xf32>
    %63 = tpu.transpose %61, [1, 0] : vector<8x8xf32> -> vector<8x8xf32>
    %64 = tpu.transpose %62, [1, 0] : vector<8x8xf32> -> vector<8x8xf32>
    %65 = tpu.concatenate %63, %64 in 1 : vector<8x8xf32>, vector<8x8xf32> -> vector<8x16xf32>
    %c0_20 = arith.constant 0 : index
    %c0_21 = arith.constant 0 : index
    %66 = vector.load %arg7[%c0_20, %c0_21] : memref<64x24xf32, #tpu.memory_space<vmem>>, vector<64x8xf32>
    %cst_22 = arith.constant dense<0.000000e+00> : vector<64x16xf32>
    %67 = tpu.matmul %66, %65, %cst_22 {dimension_numbers = #tpu.dot_dimension_numbers<[1], [0], [0], [1], [0, 0, 1, 1], [], []>} : vector<64x8xf32>, vector<8x16xf32>, vector<64x16xf32> -> vector<64x16xf32>
    %c0_23 = arith.constant 0 : index
    %c8 = arith.constant 8 : index
    %68 = vector.load %arg7[%c0_23, %c8] : memref<64x24xf32, #tpu.memory_space<vmem>>, vector<64x16xf32>
    tpu.vector_store %arg7[%c0_23, %c8], %67 {strides = array<i32>} : memref<64x24xf32, #tpu.memory_space<vmem>>, vector<64x16xf32>,
    %c0_24 = arith.constant 0 : index
    %c0_25 = arith.constant 0 : index
    %69 = tpu.strided_load %arg7[%c0_24, %c0_25] {strides = array<i32: 4, 1>} : memref<64x24xf32, #tpu.memory_space<vmem>>, vector<8x24xf32>
    %c0_26 = arith.constant 0 : index
    %c0_27 = arith.constant 0 : index
    %70 = vector.load %arg8[%c0_26, %c0_27] : memref<16x96xf32, #tpu.memory_space<vmem>>, vector<8x24xf32>
    tpu.vector_store %arg8[%c0_26, %c0_27], %69 {strides = array<i32>} : memref<16x96xf32, #tpu.memory_space<vmem>>, vector<8x24xf32>,
    %c1 = arith.constant 1 : index
    %c0_28 = arith.constant 0 : index
    %71 = tpu.strided_load %arg7[%c1, %c0_28] {strides = array<i32: 4, 1>} : memref<64x24xf32, #tpu.memory_space<vmem>>, vector<8x24xf32>
    %c0_29 = arith.constant 0 : index
    %c24 = arith.constant 24 : index
    %72 = vector.load %arg8[%c0_29, %c24] : memref<16x96xf32, #tpu.memory_space<vmem>>, vector<8x24xf32>
    tpu.vector_store %arg8[%c0_29, %c24], %71 {strides = array<i32>} : memref<16x96xf32, #tpu.memory_space<vmem>>, vector<8x24xf32>,
    %c2 = arith.constant 2 : index
    %c0_30 = arith.constant 0 : index
    %73 = tpu.strided_load %arg7[%c2, %c0_30] {strides = array<i32: 4, 1>} : memref<64x24xf32, #tpu.memory_space<vmem>>, vector<8x24xf32>
    %c0_31 = arith.constant 0 : index
    %c48 = arith.constant 48 : index
    %74 = vector.load %arg8[%c0_31, %c48] : memref<16x96xf32, #tpu.memory_space<vmem>>, vector<8x24xf32>
    tpu.vector_store %arg8[%c0_31, %c48], %73 {strides = array<i32>} : memref<16x96xf32, #tpu.memory_space<vmem>>, vector<8x24xf32>,
    %c3 = arith.constant 3 : index
    %c0_32 = arith.constant 0 : index
    %75 = tpu.strided_load %arg7[%c3, %c0_32] {strides = array<i32: 4, 1>} : memref<64x24xf32, #tpu.memory_space<vmem>>, vector<8x24xf32>
    %c0_33 = arith.constant 0 : index
    %c72 = arith.constant 72 : index
    %76 = vector.load %arg8[%c0_33, %c72] : memref<16x96xf32, #tpu.memory_space<vmem>>, vector<8x24xf32>
    tpu.vector_store %arg8[%c0_33, %c72], %75 {strides = array<i32>} : memref<16x96xf32, #tpu.memory_space<vmem>>, vector<8x24xf32>,
    %c32_34 = arith.constant 32 : index
    %c0_35 = arith.constant 0 : index
    %77 = tpu.strided_load %arg7[%c32_34, %c0_35] {strides = array<i32: 4, 1>} : memref<64x24xf32, #tpu.memory_space<vmem>>, vector<8x24xf32>
    %c8_36 = arith.constant 8 : index
    %c0_37 = arith.constant 0 : index
    %78 = vector.load %arg8[%c8_36, %c0_37] : memref<16x96xf32, #tpu.memory_space<vmem>>, vector<8x24xf32>
    tpu.vector_store %arg8[%c8_36, %c0_37], %77 {strides = array<i32>} : memref<16x96xf32, #tpu.memory_space<vmem>>, vector<8x24xf32>,
    %c33 = arith.constant 33 : index
    %c0_38 = arith.constant 0 : index
    %79 = tpu.strided_load %arg7[%c33, %c0_38] {strides = array<i32: 4, 1>} : memref<64x24xf32, #tpu.memory_space<vmem>>, vector<8x24xf32>
    %c8_39 = arith.constant 8 : index
    %c24_40 = arith.constant 24 : index
    %80 = vector.load %arg8[%c8_39, %c24_40] : memref<16x96xf32, #tpu.memory_space<vmem>>, vector<8x24xf32>
    tpu.vector_store %arg8[%c8_39, %c24_40], %79 {strides = array<i32>} : memref<16x96xf32, #tpu.memory_space<vmem>>, vector<8x24xf32>,
    %c34 = arith.constant 34 : index
    %c0_41 = arith.constant 0 : index
    %81 = tpu.strided_load %arg7[%c34, %c0_41] {strides = array<i32: 4, 1>} : memref<64x24xf32, #tpu.memory_space<vmem>>, vector<8x24xf32>
    %c8_42 = arith.constant 8 : index
    %c48_43 = arith.constant 48 : index
    %82 = vector.load %arg8[%c8_42, %c48_43] : memref<16x96xf32, #tpu.memory_space<vmem>>, vector<8x24xf32>
    tpu.vector_store %arg8[%c8_42, %c48_43], %81 {strides = array<i32>} : memref<16x96xf32, #tpu.memory_space<vmem>>, vector<8x24xf32>,
    %c35 = arith.constant 35 : index
    %c0_44 = arith.constant 0 : index
    %83 = tpu.strided_load %arg7[%c35, %c0_44] {strides = array<i32: 4, 1>} : memref<64x24xf32, #tpu.memory_space<vmem>>, vector<8x24xf32>
    %c8_45 = arith.constant 8 : index
    %c72_46 = arith.constant 72 : index
    %84 = vector.load %arg8[%c8_45, %c72_46] : memref<16x96xf32, #tpu.memory_space<vmem>>, vector<8x24xf32>
    tpu.vector_store %arg8[%c8_45, %c72_46], %83 {strides = array<i32>} : memref<16x96xf32, #tpu.memory_space<vmem>>, vector<8x24xf32>,
    %c0_47 = arith.constant 0 : index
    %c0_48 = arith.constant 0 : index
    %85 = vector.load %arg8[%c0_47, %c0_48] : memref<16x96xf32, #tpu.memory_space<vmem>>, vector<16x96xf32>
    %c0_49 = arith.constant 0 : index
    %c0_50 = arith.constant 0 : index
    %86 = vector.load %arg4[%c0_49, %c0_50] : memref<96x48xf32, #tpu.memory_space<vmem>>, vector<96x48xf32>
    %cst_51 = arith.constant dense<0.000000e+00> : vector<16x48xf32>
    %87 = tpu.matmul %85, %86, %cst_51 {dimension_numbers = #tpu.dot_dimension_numbers<[1], [0], [0], [1], [0, 0, 1, 1], [], []>} : vector<16x96xf32>, vector<96x48xf32>, vector<16x48xf32> -> vector<16x48xf32>
    %c0_52 = arith.constant 0 : index
    %c0_53 = arith.constant 0 : index
    %88 = vector.load %arg5[%c0_52, %c0_53] : memref<1x48xf32, #tpu.memory_space<vmem>>, vector<1x48xf32>
    %89 = vector.broadcast %88 : vector<1x48xf32> to vector<16x48xf32>
    %90 = arith.addf %87, %89 : vector<16x48xf32>
    %91 = math.tanh %90 : vector<16x48xf32>
    %92 = arith.mulf %91, %91 : vector<16x48xf32>
    %c0_54 = arith.constant 0 : index
    %c0_55 = arith.constant 0 : index
    %93 = vector.load %arg9[%c0_54, %c0_55] : memref<16x48xf32, #tpu.memory_space<vmem>>, vector<16x48xf32>
    tpu.vector_store %arg9[%c0_54, %c0_55], %92 {strides = array<i32>} : memref<16x48xf32, #tpu.memory_space<vmem>>, vector<16x48xf32>,
    %c0_56 = arith.constant 0 : index
    %c0_57 = arith.constant 0 : index
    %94 = tpu.strided_load %arg9[%c0_56, %c0_57] {strides = array<i32: 2, 1>} : memref<16x48xf32, #tpu.memory_space<vmem>>, vector<4x48xf32>
    %c1_58 = arith.constant 1 : index
    %c0_59 = arith.constant 0 : index
    %95 = tpu.strided_load %arg9[%c1_58, %c0_59] {strides = array<i32: 2, 1>} : memref<16x48xf32, #tpu.memory_space<vmem>>, vector<4x48xf32>
    %96 = arith.addf %94, %95 : vector<4x48xf32>
    %97 = math.sqrt %96 : vector<4x48xf32>
    %98 = vector.extract_strided_slice %97 {offsets = [0, 0], sizes = [4, 16], strides = [1, 1]} : vector<4x48xf32> to vector<4x16xf32>
    %99 = vector.extract_strided_slice %97 {offsets = [0, 16], sizes = [4, 16], strides = [1, 1]} : vector<4x48xf32> to vector<4x16xf32>
    %100 = arith.addf %98, %99 : vector<4x16xf32>
    %101 = vector.extract_strided_slice %97 {offsets = [0, 32], sizes = [4, 16], strides = [1, 1]} : vector<4x48xf32> to vector<4x16xf32>
    %102 = arith.addf %100, %101 : vector<4x16xf32>
    %cst_60 = arith.constant 0.000000e+00 : f32
    %103 = vector.broadcast %cst_60 : f32 to vector<4x16xf32>
    %104 = arith.maximumf %102, %103 : vector<4x16xf32>
    %c0_61 = arith.constant 0 : index
    %c0_62 = arith.constant 0 : index
    %105 = vector.load %arg6[%c0_61, %c0_62] : memref<8x16xf32, #tpu.memory_space<vmem>>, vector<4x16xf32>
    tpu.vector_store %arg6[%c0_61, %c0_62], %104 {strides = array<i32>} : memref<8x16xf32, #tpu.memory_space<vmem>>, vector<4x16xf32>,
    %c8_63 = arith.constant 8 : index
    %c0_64 = arith.constant 0 : index
    %106 = tpu.strided_load %arg9[%c8_63, %c0_64] {strides = array<i32: 2, 1>} : memref<16x48xf32, #tpu.memory_space<vmem>>, vector<4x48xf32>
    %c9 = arith.constant 9 : index
    %c0_65 = arith.constant 0 : index
    %107 = tpu.strided_load %arg9[%c9, %c0_65] {strides = array<i32: 2, 1>} : memref<16x48xf32, #tpu.memory_space<vmem>>, vector<4x48xf32>
    %108 = arith.addf %106, %107 : vector<4x48xf32>
    %109 = math.sqrt %108 : vector<4x48xf32>
    %110 = vector.extract_strided_slice %109 {offsets = [0, 0], sizes = [4, 16], strides = [1, 1]} : vector<4x48xf32> to vector<4x16xf32>
    %111 = vector.extract_strided_slice %109 {offsets = [0, 16], sizes = [4, 16], strides = [1, 1]} : vector<4x48xf32> to vector<4x16xf32>
    %112 = arith.addf %110, %111 : vector<4x16xf32>
    %113 = vector.extract_strided_slice %109 {offsets = [0, 32], sizes = [4, 16], strides = [1, 1]} : vector<4x48xf32> to vector<4x16xf32>
    %114 = arith.addf %112, %113 : vector<4x16xf32>
    %cst_66 = arith.constant 0.000000e+00 : f32
    %115 = vector.broadcast %cst_66 : f32 to vector<4x16xf32>
    %116 = arith.maximumf %114, %115 : vector<4x16xf32>
    %c4 = arith.constant 4 : index
    %c0_67 = arith.constant 0 : index
    %117 = vector.load %arg6[%c4, %c0_67] : memref<8x16xf32, #tpu.memory_space<vmem>>, vector<4x16xf32>
    tpu.vector_store %arg6[%c4, %c0_67], %116 {strides = array<i32>} : memref<8x16xf32, #tpu.memory_space<vmem>>, vector<4x16xf32>,
    return
  }
}

</mosaic_0001>

<llo_original>
// kernel: tpu_custom_call.1
$region0: #{tpu_custom_call.1}
  #allocation0 [shape = 'u32[]', space=smem, size = 0x4, offset = 0x4, fixed_abs, tag = 'smem constant byte address 0x4 - core index']
  #allocation1 [shape = 'u32[144,128]{1,0:T(1,128)}', space=vmem, size = 0x12000, scoped, tag = 'internal scratch']
  #allocation2 [shape = 'f32[64,24]{1,0:T(8,128)}', space=vmem, size = 0x8000, scoped, tag = 'scratch operand']
  #allocation3 [shape = 'f32[16,96]{1,0:T(8,128)}', space=vmem, size = 0x2000, scoped, tag = 'scratch operand']
  #allocation4 [shape = 'f32[16,48]{1,0:T(8,128)}', space=vmem, size = 0x2000, scoped, tag = 'scratch operand']
  %s0 = inlined_call_operand.vmem [shape: f32[64,8], index: 0, kind: input, shape index: {}]
  %s1 = inlined_call_operand.vmem [shape: f32[8,8], index: 1, kind: input, shape index: {}]
  %s2 = inlined_call_operand.vmem [shape: f32[32,1], index: 2, kind: input, shape index: {}]
  %s3 = inlined_call_operand.vmem [shape: f32[32,1], index: 3, kind: input, shape index: {}]
  %s4 = inlined_call_operand.vmem [shape: f32[96,48], index: 4, kind: input, shape index: {}]
  %s5 = inlined_call_operand.vmem [shape: f32[1,48], index: 5, kind: input, shape index: {}]
  %s6 = inlined_call_operand.hbm [shape: f32[8,16], index: 6, kind: output, shape index: {}]
  %s7 = sld [smem:[#allocation0]]
  $region34: #{tpu_custom_call.1} parent=0
    _
  %s9 = ssub.s32 1, %s7
  %s10 = scalar_select 0, %s9, %s7
  $region1: #{tpu_custom_call.1} parent=0
    #allocation5 [shape = 'u8[4096]{0}', space=vmem, size = 0x1000, scoped, tag = 'output window, operand 0, single buffered']
    #allocation6 [shape = 's32[1]{0}', space=sflag, size = 0x4, scoped, tag = 'scoped memory for tpu_custom_call.1']
    %11 = vsyncpa [#allocation6], 0
    // Predicated region
    $region2: #{tpu_custom_call.1} parent=1 // pred_check
      _
    $region3: #{tpu_custom_call.1} parent=1 // pred_check_branch
      %13 = sbr.rel (0) target = $region5
    $region4: #{tpu_custom_call.1} parent=1 // pred_region
      _
    $region5: #{tpu_custom_call.1} parent=1 // pred_fallthru
      _
    // Predicated region
    $region6: #{tpu_custom_call.1} parent=1 // pred_check
      _
    $region7: #{tpu_custom_call.1} parent=1 // pred_check_branch
      %15 = sbr.rel (0) target = $region9
    $region8: #{tpu_custom_call.1} parent=1 // pred_region
      _
    $region9: #{tpu_custom_call.1} parent=1 // pred_fallthru
      _
    // Predicated region
    $region10: #{tpu_custom_call.1} parent=1 // pred_check
      _
    $region11: #{tpu_custom_call.1} parent=1 // pred_check_branch
      %17 = sbr.rel (0) target = $region13
    $region12: #{tpu_custom_call.1} parent=1 // pred_region
      _
    $region13: #{tpu_custom_call.1} parent=1 // pred_fallthru
      _
    // Predicated region
    $region14: #{tpu_custom_call.1} parent=1 // pred_check
      _
    $region15: #{tpu_custom_call.1} parent=1 // pred_check_branch
      %19 = sbr.rel (0) target = $region17
    $region16: #{tpu_custom_call.1} parent=1 // pred_region
      _
    $region17: #{tpu_custom_call.1} parent=1 // pred_fallthru
      _
    // Predicated region
    $region18: #{tpu_custom_call.1} parent=1 // pred_check
      _
    $region19: #{tpu_custom_call.1} parent=1 // pred_check_branch
      %21 = sbr.rel (0) target = $region21
    $region20: #{tpu_custom_call.1} parent=1 // pred_region
      _
    $region21: #{tpu_custom_call.1} parent=1 // pred_fallthru
      _
    // Predicated region
    $region22: #{tpu_custom_call.1} parent=1 // pred_check
      _
    $region23: #{tpu_custom_call.1} parent=1 // pred_check_branch
      %23 = sbr.rel (0) target = $region25
    $region24: #{tpu_custom_call.1} parent=1 // pred_region
      _
    $region25: #{tpu_custom_call.1} parent=1 // pred_fallthru
      _
    %v24 = vld [vmem:[%s0] sm:$0xff]
    %v25 = vld [vmem:[%s0 + $0x8] sm:$0xff]
    %v26 = vld [vmem:[%s0 + $0x10] sm:$0xff]
    %v27 = vld [vmem:[%s0 + $0x18] sm:$0xff]
    %v28 = vld [vmem:[%s0 + $0x20] sm:$0xff]
    %v29 = vld [vmem:[%s0 + $0x28] sm:$0xff]
    %v30 = vld [vmem:[%s0 + $0x30] sm:$0xff]
    %v31 = vld [vmem:[%s0 + $0x38] sm:$0xff]
    %v32 = vadd.f32 %v24, %v28
    %v33 = vadd.f32 %v25, %v29
    %v34 = vadd.f32 %v26, %v30
    %v35 = vadd.f32 %v27, %v31
    %vm36 = vcmask 64512
    %v37 = vsel %vm36, %v32, 0.0
    %38 = vadd.xlane.f32.xlu0 %v37
    %v39 = vpop.xlane.xlu0 %38
    %v40 = vsel %vm36, %v33, 0.0
    %41 = vadd.xlane.f32.xlu0 %v40
    %v42 = vpop.xlane.xlu0 %41
    %v43 = vsel %vm36, %v34, 0.0
    %44 = vadd.xlane.f32.xlu0 %v43
    %v45 = vpop.xlane.xlu0 %44
    %v46 = vsel %vm36, %v35, 0.0
    %47 = vadd.xlane.f32.xlu0 %v46
    %v48 = vpop.xlane.xlu0 %47
    %v49 = vrcp.pop 16.0
    %v50 = vmul.f32 %v39, %v49
    %v51 = vmul.f32 %v42, %v49
    %v52 = vmul.f32 %v45, %v49
    %v53 = vmul.f32 %v48, %v49
    %v54 = vsub.f32 %v24, %v50
    %v55 = vsub.f32 %v25, %v51
    %v56 = vsub.f32 %v26, %v52
    %v57 = vsub.f32 %v27, %v53
    %v58 = vmul.f32 %v54, %v54
    %v59 = vmul.f32 %v55, %v55
    %v60 = vmul.f32 %v56, %v56
    %v61 = vmul.f32 %v57, %v57
    %v62 = vsub.f32 %v28, %v50
    %v63 = vsub.f32 %v29, %v51
    %v64 = vsub.f32 %v30, %v52
    %v65 = vsub.f32 %v31, %v53
    %v66 = vmul.f32 %v62, %v62
    %v67 = vmul.f32 %v63, %v63
    %v68 = vmul.f32 %v64, %v64
    %v69 = vmul.f32 %v65, %v65
    %v70 = vadd.f32 %v58, %v66
    %v71 = vadd.f32 %v59, %v67
    %v72 = vadd.f32 %v60, %v68
    %v73 = vadd.f32 %v61, %v69
    %v74 = vsel %vm36, %v70, 0.0
    %75 = vadd.xlane.f32.xlu0 %v74
    %v76 = vpop.xlane.xlu0 %75
    %v77 = vsel %vm36, %v71, 0.0
    %78 = vadd.xlane.f32.xlu0 %v77
    %v79 = vpop.xlane.xlu0 %78
    %v80 = vsel %vm36, %v72, 0.0
    %81 = vadd.xlane.f32.xlu0 %v80
    %v82 = vpop.xlane.xlu0 %81
    %v83 = vsel %vm36, %v73, 0.0
    %84 = vadd.xlane.f32.xlu0 %v83
    %v85 = vpop.xlane.xlu0 %84
    %v86 = vmul.f32 %v76, %v49
    %v87 = vmul.f32 %v79, %v49
    %v88 = vmul.f32 %v82, %v49
    %v89 = vmul.f32 %v85, %v49
    %v90 = vld [vmem:[%s2] sm:$0xff]
    %v91 = vld [vmem:[%s2 + $0x8] sm:$0xff]
    %v92 = vld [vmem:[%s2 + $0x10] sm:$0xff]
    %v93 = vld [vmem:[%s2 + $0x18] sm:$0xff]
    %v94 = vadd.f32 %v86, 1e-05
    %v95 = vadd.f32 %v87, 1e-05
    %v96 = vadd.f32 %v88, 1e-05
    %v97 = vadd.f32 %v89, 1e-05
    %v98 = vrsqrt.pop %v94
    %v99 = vrsqrt.pop %v95
    %v100 = vrsqrt.pop %v96
    %v101 = vrsqrt.pop %v97
    %v102 = vmul.f32 %v90, %v98
    %v103 = vmul.f32 %v91, %v99
    %v104 = vmul.f32 %v92, %v100
    %v105 = vmul.f32 %v93, %v101
    %v106 = vld [vmem:[%s3] sm:$0xff]
    %v107 = vld [vmem:[%s3 + $0x8] sm:$0xff]
    %v108 = vld [vmem:[%s3 + $0x10] sm:$0xff]
    %v109 = vld [vmem:[%s3 + $0x18] sm:$0xff]
    %111 = vset.pattern.permute.xlu0 0
    %112 = vperm.xlu0 %111, %v102
    %v113 = vpop.permute.xlu0 %112
    %116 = vset.pattern.permute.xlu0 0
    %117 = vperm.xlu0 %116, %v103
    %v118 = vpop.permute.xlu0 %117
    %121 = vset.pattern.permute.xlu0 0
    %122 = vperm.xlu0 %121, %v104
    %v123 = vpop.permute.xlu0 %122
    %126 = vset.pattern.permute.xlu0 0
    %127 = vperm.xlu0 %126, %v105
    %v128 = vpop.permute.xlu0 %127
    %v130 = vmul.f32 %v54, %v113
    %v131 = vmul.f32 %v55, %v118
    %v132 = vmul.f32 %v56, %v123
    %v133 = vmul.f32 %v57, %v128
    %135 = vset.pattern.permute.xlu0 0
    %136 = vperm.xlu0 %135, %v106
    %v137 = vpop.permute.xlu0 %136
    %140 = vset.pattern.permute.xlu0 0
    %141 = vperm.xlu0 %140, %v107
    %v142 = vpop.permute.xlu0 %141
    %145 = vset.pattern.permute.xlu0 0
    %146 = vperm.xlu0 %145, %v108
    %v147 = vpop.permute.xlu0 %146
    %150 = vset.pattern.permute.xlu0 0
    %151 = vperm.xlu0 %150, %v109
    %v152 = vpop.permute.xlu0 %151
    %v154 = vadd.f32 %v130, %v137
    %v155 = vadd.f32 %v131, %v142
    %v156 = vadd.f32 %v132, %v147
    %v157 = vadd.f32 %v133, %v152
    %158 = vst.msk [vmem:[#allocation2] sm:$0xff] %vm36, %v154
    %159 = vst.msk [vmem:[#allocation2 + $0x8] sm:$0xff] %vm36, %v155
    %160 = vst.msk [vmem:[#allocation2 + $0x10] sm:$0xff] %vm36, %v156
    %161 = vst.msk [vmem:[#allocation2 + $0x18] sm:$0xff] %vm36, %v157
    %v162 = vmul.f32 %v62, %v113
    %v163 = vmul.f32 %v63, %v118
    %v164 = vmul.f32 %v64, %v123
    %v165 = vmul.f32 %v65, %v128
    %v166 = vadd.f32 %v162, %v137
    %v167 = vadd.f32 %v163, %v142
    %v168 = vadd.f32 %v164, %v147
    %v169 = vadd.f32 %v165, %v152
    %170 = vst.msk [vmem:[#allocation2 + $0x20] sm:$0xff] %vm36, %v166
    %171 = vst.msk [vmem:[#allocation2 + $0x28] sm:$0xff] %vm36, %v167
    %172 = vst.msk [vmem:[#allocation2 + $0x30] sm:$0xff] %vm36, %v168
    %173 = vst.msk [vmem:[#allocation2 + $0x38] sm:$0xff] %vm36, %v169
    %v174 = vld [vmem:[%s1] sm:$0xff]
    %v175 = vmax.f32 %v174, 0.0
    %176 = vxpose.xlu0.b32.start [1/16] %v175, 128
    %177 = vxpose.xlu0.b32.cont [2/16] 0.0, 128
    %178 = vxpose.xlu0.b32.cont [3/16] 0.0, 128
    %179 = vxpose.xlu0.b32.cont [4/16] 0.0, 128
    %180 = vxpose.xlu0.b32.cont [5/16] 0.0, 128
    %181 = vxpose.xlu0.b32.cont [6/16] 0.0, 128
    %182 = vxpose.xlu0.b32.cont [7/16] 0.0, 128
    %183 = vxpose.xlu0.b32.cont [8/16] 0.0, 128
    %184 = vxpose.xlu0.b32.cont [9/16] 0.0, 128
    %185 = vxpose.xlu0.b32.cont [10/16] 0.0, 128
    %186 = vxpose.xlu0.b32.cont [11/16] 0.0, 128
    %187 = vxpose.xlu0.b32.cont [12/16] 0.0, 128
    %188 = vxpose.xlu0.b32.cont [13/16] 0.0, 128
    %189 = vxpose.xlu0.b32.cont [14/16] 0.0, 128
    %190 = vxpose.xlu0.b32.cont [15/16] 0.0, 128
    %191 = vxpose.xlu0.b32.end [16/16] 0.0, 128
    %v192 = vpop.trf.xlu0
    %v193 = vpop.trf.xlu0
    %v194 = vpop.trf.xlu0
    %v195 = vpop.trf.xlu0
    %v196 = vpop.trf.xlu0
    %v197 = vpop.trf.xlu0
    %v198 = vpop.trf.xlu0
    %v199 = vpop.trf.xlu0
    %v200 = vpop.trf.xlu0
    %v201 = vpop.trf.xlu0
    %v202 = vpop.trf.xlu0
    %v203 = vpop.trf.xlu0
    %v204 = vpop.trf.xlu0
    %v205 = vpop.trf.xlu0
    %v206 = vpop.trf.xlu0
    %v207 = vpop.trf.xlu0
    %v208 = vadd.f32 %v175, %v192
    %v209 = vsel %vm36, %v208, 0.0
    %210 = vadd.xlane.f32.xlu0 %v209
    %v211 = vpop.xlane.xlu0 %210
    %v212 = vrot.slane %v209, 4
    %v213 = vadd.f32 %v209, %v212
    %v214 = vrot.slane %v213, 2
    %v215 = vadd.f32 %v213, %v214
    %v216 = vrot.slane %v215, 1
    %v217 = vadd.f32 %v215, %v216
    %v218 = vadd.f32 %v211, 1e-10
    %v219 = vrsqrt.pop %v218
    %v220 = vmul.f32 %v208, %v219
    %v221 = vadd.f32 %v217, 1e-10
    %v222 = vrsqrt.pop %v221
    %v223 = vmul.f32 %v220, %v222
    %v225 = vsel %vm36, %v223, 0
    %227 = vmatprep.subr.mxu0 0.0
    %228 = vmatpush1.msra.mxu0 0.0
    %229 = vmatprep.subr.mxu0 0.0
    %230 = vmatpush1.msra.mxu0 0.0
    %231 = vmatprep.subr.mxu0 0.0
    %232 = vmatpush1.msra.mxu0 0.0
    %233 = vmatprep.subr.mxu0 0.0
    %234 = vmatpush1.msra.mxu0 0.0
    %235 = vmatprep.subr.mxu0 0.0
    %236 = vmatpush1.msra.mxu0 0.0
    %237 = vmatprep.subr.mxu0 0.0
    %238 = vmatpush1.msra.mxu0 0.0
    %239 = vmatprep.subr.mxu0 0.0
    %240 = vmatpush1.msra.mxu0 0.0
    %241 = vmatprep.subr.mxu0 0.0
    %242 = vmatpush1.msra.mxu0 0.0
    %243 = vmatprep.subr.mxu0 0.0
    %244 = vmatpush1.msra.mxu0 0.0
    %245 = vmatprep.subr.mxu0 0.0
    %246 = vmatpush1.msra.mxu0 0.0
    %247 = vmatprep.subr.mxu0 0.0
    %248 = vmatpush1.msra.mxu0 0.0
    %249 = vmatprep.subr.mxu0 0.0
    %250 = vmatpush1.msra.mxu0 0.0
    %251 = vmatprep.subr.mxu0 0.0
    %252 = vmatpush1.msra.mxu0 0.0
    %253 = vmatprep.subr.mxu0 0.0
    %254 = vmatpush1.msra.mxu0 0.0
    %255 = vmatprep.subr.mxu0 0.0
    %256 = vmatpush1.msra.mxu0 0.0
    %257 = vmatprep.subr.mxu0 0.0
    %258 = vmatpush1.msra.mxu0 %v223
    %259 = vmatprep.subr.mxu0 0.0
    %260 = vmatpush2.msra.mxu0 0.0
    %261 = vmatprep.subr.mxu0 0.0
    %262 = vmatpush2.msra.mxu0 0.0
    %263 = vmatprep.subr.mxu0 0.0
    %264 = vmatpush2.msra.mxu0 0.0
    %265 = vmatprep.subr.mxu0 0.0
    %266 = vmatpush2.msra.mxu0 0.0
    %267 = vmatprep.subr.mxu0 0.0
    %268 = vmatpush2.msra.mxu0 0.0
    %269 = vmatprep.subr.mxu0 0.0
    %270 = vmatpush2.msra.mxu0 0.0
    %271 = vmatprep.subr.mxu0 0.0
    %272 = vmatpush2.msra.mxu0 0.0
    %273 = vmatprep.subr.mxu0 0.0
    %274 = vmatpush2.msra.mxu0 0.0
    %275 = vmatprep.subr.mxu0 0.0
    %276 = vmatpush2.msra.mxu0 0.0
    %277 = vmatprep.subr.mxu0 0.0
    %278 = vmatpush2.msra.mxu0 0.0
    %279 = vmatprep.subr.mxu0 0.0
    %280 = vmatpush2.msra.mxu0 0.0
    %281 = vmatprep.subr.mxu0 0.0
    %282 = vmatpush2.msra.mxu0 0.0
    %283 = vmatprep.subr.mxu0 0.0
    %284 = vmatpush2.msra.mxu0 0.0
    %285 = vmatprep.subr.mxu0 0.0
    %286 = vmatpush2.msra.mxu0 0.0
    %287 = vmatprep.subr.mxu0 0.0
    %288 = vmatpush2.msra.mxu0 0.0
    %289 = vmatprep.subr.mxu0 0.0
    %290 = vmatpush2.msra.mxu0 0.0
    %291 = vmatprep.mubr.f32.mxu0 0.0
    %292 = vmatmul.mubr.f32.gmra.mxu0 %v225
    %v293 = vpop.f32.mrf.mxu0
    %v294 = vadd.f32 0.0, %v293
    %v295 = vpop.f32.mrf.mxu0
    %296 = vdwg.mxu0
    %297 = vxpose.xlu0.b32.start [1/16] %v223, 128
    %298 = vxpose.xlu0.b32.cont [2/16] 0.0, 128
    %299 = vxpose.xlu0.b32.cont [3/16] 0.0, 128
    %300 = vxpose.xlu0.b32.cont [4/16] 0.0, 128
    %301 = vxpose.xlu0.b32.cont [5/16] 0.0, 128
    %302 = vxpose.xlu0.b32.cont [6/16] 0.0, 128
    %303 = vxpose.xlu0.b32.cont [7/16] 0.0, 128
    %304 = vxpose.xlu0.b32.cont [8/16] 0.0, 128
    %305 = vxpose.xlu0.b32.cont [9/16] 0.0, 128
    %306 = vxpose.xlu0.b32.cont [10/16] 0.0, 128
    %307 = vxpose.xlu0.b32.cont [11/16] 0.0, 128
    %308 = vxpose.xlu0.b32.cont [12/16] 0.0, 128
    %309 = vxpose.xlu0.b32.cont [13/16] 0.0, 128
    %310 = vxpose.xlu0.b32.cont [14/16] 0.0, 128
    %311 = vxpose.xlu0.b32.cont [15/16] 0.0, 128
    %312 = vxpose.xlu0.b32.end [16/16] 0.0, 128
    %v313 = vpop.trf.xlu0
    %v314 = vpop.trf.xlu0
    %v315 = vpop.trf.xlu0
    %v316 = vpop.trf.xlu0
    %v317 = vpop.trf.xlu0
    %v318 = vpop.trf.xlu0
    %v319 = vpop.trf.xlu0
    %v320 = vpop.trf.xlu0
    %v321 = vpop.trf.xlu0
    %v322 = vpop.trf.xlu0
    %v323 = vpop.trf.xlu0
    %v324 = vpop.trf.xlu0
    %v325 = vpop.trf.xlu0
    %v326 = vpop.trf.xlu0
    %v327 = vpop.trf.xlu0
    %v328 = vpop.trf.xlu0
    %329 = vxpose.xlu0.b32.start [1/16] %v294, 128
    %330 = vxpose.xlu0.b32.cont [2/16] 0.0, 128
    %331 = vxpose.xlu0.b32.cont [3/16] 0.0, 128
    %332 = vxpose.xlu0.b32.cont [4/16] 0.0, 128
    %333 = vxpose.xlu0.b32.cont [5/16] 0.0, 128
    %334 = vxpose.xlu0.b32.cont [6/16] 0.0, 128
    %335 = vxpose.xlu0.b32.cont [7/16] 0.0, 128
    %336 = vxpose.xlu0.b32.cont [8/16] 0.0, 128
    %337 = vxpose.xlu0.b32.cont [9/16] 0.0, 128
    %338 = vxpose.xlu0.b32.cont [10/16] 0.0, 128
    %339 = vxpose.xlu0.b32.cont [11/16] 0.0, 128
    %340 = vxpose.xlu0.b32.cont [12/16] 0.0, 128
    %341 = vxpose.xlu0.b32.cont [13/16] 0.0, 128
    %342 = vxpose.xlu0.b32.cont [14/16] 0.0, 128
    %343 = vxpose.xlu0.b32.cont [15/16] 0.0, 128
    %344 = vxpose.xlu0.b32.end [16/16] 0.0, 128
    %v345 = vpop.trf.xlu0
    %v346 = vpop.trf.xlu0
    %v347 = vpop.trf.xlu0
    %v348 = vpop.trf.xlu0
    %v349 = vpop.trf.xlu0
    %v350 = vpop.trf.xlu0
    %v351 = vpop.trf.xlu0
    %v352 = vpop.trf.xlu0
    %v353 = vpop.trf.xlu0
    %v354 = vpop.trf.xlu0
    %v355 = vpop.trf.xlu0
    %v356 = vpop.trf.xlu0
    %v357 = vpop.trf.xlu0
    %v358 = vpop.trf.xlu0
    %v359 = vpop.trf.xlu0
    %v360 = vpop.trf.xlu0
    %362 = vrot.lane.b32.xlu0 %v345, 8
    %v363 = vpop.permute.xlu0 %362
    %v365 = vsel %vm36, %v313, %v363
    %v366 = vld [vmem:[#allocation2] sm:$0xff]
    %v367 = vld [vmem:[#allocation2 + $0x8] sm:$0xff]
    %v368 = vld [vmem:[#allocation2 + $0x10] sm:$0xff]
    %v369 = vld [vmem:[#allocation2 + $0x18] sm:$0xff]
    %v370 = vld [vmem:[#allocation2 + $0x20] sm:$0xff]
    %v371 = vld [vmem:[#allocation2 + $0x28] sm:$0xff]
    %v372 = vld [vmem:[#allocation2 + $0x30] sm:$0xff]
    %v373 = vld [vmem:[#allocation2 + $0x38] sm:$0xff]
    %v375 = vsel %vm36, %v366, 0
    %v378 = vsel %vm36, %v367, 0
    %v381 = vsel %vm36, %v368, 0
    %v384 = vsel %vm36, %v369, 0
    %v387 = vsel %vm36, %v370, 0
    %v390 = vsel %vm36, %v371, 0
    %v393 = vsel %vm36, %v372, 0
    %v396 = vsel %vm36, %v373, 0
    %398 = vmatprep.subr.mxu0 0.0
    %399 = vmatpush1.msra.mxu0 0.0
    %400 = vmatprep.subr.mxu0 0.0
    %401 = vmatpush1.msra.mxu0 0.0
    %402 = vmatprep.subr.mxu0 0.0
    %403 = vmatpush1.msra.mxu0 0.0
    %404 = vmatprep.subr.mxu0 0.0
    %405 = vmatpush1.msra.mxu0 0.0
    %406 = vmatprep.subr.mxu0 0.0
    %407 = vmatpush1.msra.mxu0 0.0
    %408 = vmatprep.subr.mxu0 0.0
    %409 = vmatpush1.msra.mxu0 0.0
    %410 = vmatprep.subr.mxu0 0.0
    %411 = vmatpush1.msra.mxu0 0.0
    %412 = vmatprep.subr.mxu0 0.0
    %413 = vmatpush1.msra.mxu0 0.0
    %414 = vmatprep.subr.mxu0 0.0
    %415 = vmatpush1.msra.mxu0 0.0
    %416 = vmatprep.subr.mxu0 0.0
    %417 = vmatpush1.msra.mxu0 0.0
    %418 = vmatprep.subr.mxu0 0.0
    %419 = vmatpush1.msra.mxu0 0.0
    %420 = vmatprep.subr.mxu0 0.0
    %421 = vmatpush1.msra.mxu0 0.0
    %422 = vmatprep.subr.mxu0 0.0
    %423 = vmatpush1.msra.mxu0 0.0
    %424 = vmatprep.subr.mxu0 0.0
    %425 = vmatpush1.msra.mxu0 0.0
    %426 = vmatprep.subr.mxu0 0.0
    %427 = vmatpush1.msra.mxu0 0.0
    %428 = vmatprep.subr.mxu0 0.0
    %429 = vmatpush1.msra.mxu0 %v365
    %430 = vmatprep.subr.mxu0 0.0
    %431 = vmatpush2.msra.mxu0 0.0
    %432 = vmatprep.subr.mxu0 0.0
    %433 = vmatpush2.msra.mxu0 0.0
    %434 = vmatprep.subr.mxu0 0.0
    %435 = vmatpush2.msra.mxu0 0.0
    %436 = vmatprep.subr.mxu0 0.0
    %437 = vmatpush2.msra.mxu0 0.0
    %438 = vmatprep.subr.mxu0 0.0
    %439 = vmatpush2.msra.mxu0 0.0
    %440 = vmatprep.subr.mxu0 0.0
    %441 = vmatpush2.msra.mxu0 0.0
    %442 = vmatprep.subr.mxu0 0.0
    %443 = vmatpush2.msra.mxu0 0.0
    %444 = vmatprep.subr.mxu0 0.0
    %445 = vmatpush2.msra.mxu0 0.0
    %446 = vmatprep.subr.mxu0 0.0
    %447 = vmatpush2.msra.mxu0 0.0
    %448 = vmatprep.subr.mxu0 0.0
    %449 = vmatpush2.msra.mxu0 0.0
    %450 = vmatprep.subr.mxu0 0.0
    %451 = vmatpush2.msra.mxu0 0.0
    %452 = vmatprep.subr.mxu0 0.0
    %453 = vmatpush2.msra.mxu0 0.0
    %454 = vmatprep.subr.mxu0 0.0
    %455 = vmatpush2.msra.mxu0 0.0
    %456 = vmatprep.subr.mxu0 0.0
    %457 = vmatpush2.msra.mxu0 0.0
    %458 = vmatprep.subr.mxu0 0.0
    %459 = vmatpush2.msra.mxu0 0.0
    %460 = vmatprep.subr.mxu0 0.0
    %461 = vmatpush2.msra.mxu0 0.0
    %462 = vmatprep.mubr.f32.mxu0 0.0
    %463 = vmatmul.mubr.f32.gmra.mxu0 %v375
    %v464 = vpop.f32.mrf.mxu0
    %v465 = vadd.f32 0.0, %v464
    %v466 = vpop.f32.mrf.mxu0
    %467 = vmatprep.mubr.f32.mxu0 0.0
    %468 = vmatmul.mubr.f32.gmra.mxu0 %v378
    %v469 = vpop.f32.mrf.mxu0
    %v470 = vadd.f32 0.0, %v469
    %v471 = vpop.f32.mrf.mxu0
    %472 = vmatprep.mubr.f32.mxu0 0.0
    %473 = vmatmul.mubr.f32.gmra.mxu0 %v381
    %v474 = vpop.f32.mrf.mxu0
    %v475 = vadd.f32 0.0, %v474
    %v476 = vpop.f32.mrf.mxu0
    %477 = vmatprep.mubr.f32.mxu0 0.0
    %478 = vmatmul.mubr.f32.gmra.mxu0 %v384
    %v479 = vpop.f32.mrf.mxu0
    %v480 = vadd.f32 0.0, %v479
    %v481 = vpop.f32.mrf.mxu0
    %482 = vmatprep.mubr.f32.mxu0 0.0
    %483 = vmatmul.mubr.f32.gmra.mxu0 %v387
    %v484 = vpop.f32.mrf.mxu0
    %v485 = vadd.f32 0.0, %v484
    %v486 = vpop.f32.mrf.mxu0
    %487 = vmatprep.mubr.f32.mxu0 0.0
    %488 = vmatmul.mubr.f32.gmra.mxu0 %v390
    %v489 = vpop.f32.mrf.mxu0
    %v490 = vadd.f32 0.0, %v489
    %v491 = vpop.f32.mrf.mxu0
    %492 = vmatprep.mubr.f32.mxu0 0.0
    %493 = vmatmul.mubr.f32.gmra.mxu0 %v393
    %v494 = vpop.f32.mrf.mxu0
    %v495 = vadd.f32 0.0, %v494
    %v496 = vpop.f32.mrf.mxu0
    %497 = vmatprep.mubr.f32.mxu0 0.0
    %498 = vmatmul.mubr.f32.gmra.mxu0 %v396
    %v499 = vpop.f32.mrf.mxu0
    %v500 = vadd.f32 0.0, %v499
    %v501 = vpop.f32.mrf.mxu0
    %502 = vdwg.mxu0
    %511 = vrot.lane.b32.xlu0 %v465, 8
    %v512 = vpop.permute.xlu0 %511
    %513 = vrot.lane.b32.xlu0 %v470, 8
    %v514 = vpop.permute.xlu0 %513
    %515 = vrot.lane.b32.xlu0 %v475, 8
    %v516 = vpop.permute.xlu0 %515
    %517 = vrot.lane.b32.xlu0 %v480, 8
    %v518 = vpop.permute.xlu0 %517
    %519 = vrot.lane.b32.xlu0 %v485, 8
    %v520 = vpop.permute.xlu0 %519
    %521 = vrot.lane.b32.xlu0 %v490, 8
    %v522 = vpop.permute.xlu0 %521
    %523 = vrot.lane.b32.xlu0 %v495, 8
    %v524 = vpop.permute.xlu0 %523
    %525 = vrot.lane.b32.xlu0 %v500, 8
    %v526 = vpop.permute.xlu0 %525
    %vm535 = vcmask 195648
    %536 = vst.msk [vmem:[#allocation2] sm:$0xff] %vm535, %v512
    %537 = vst.msk [vmem:[#allocation2 + $0x8] sm:$0xff] %vm535, %v514
    %538 = vst.msk [vmem:[#allocation2 + $0x10] sm:$0xff] %vm535, %v516
    %539 = vst.msk [vmem:[#allocation2 + $0x18] sm:$0xff] %vm535, %v518
    %540 = vst.msk [vmem:[#allocation2 + $0x20] sm:$0xff] %vm535, %v520
    %541 = vst.msk [vmem:[#allocation2 + $0x28] sm:$0xff] %vm535, %v522
    %542 = vst.msk [vmem:[#allocation2 + $0x30] sm:$0xff] %vm535, %v524
    %543 = vst.msk [vmem:[#allocation2 + $0x38] sm:$0xff] %vm535, %v526
    %v544 = vld [vmem:[#allocation2] ss:$4 sm:$0xff]
    %vm545 = vcmask 195584
    %546 = vst.msk [vmem:[#allocation3] sm:$0xff] %vm545, %v544
    %s547 = scalar_lea.vmem [#allocation2], 1
    %v548 = vld [vmem:[%s547] ss:$4 sm:$0xff]
    %550 = vrot.lane.b32.xlu0 %v548, 24
    %v551 = vpop.permute.xlu0 %550
    %vm553 = vcmask 392384
    %554 = vst.msk [vmem:[#allocation3] sm:$0xff] %vm553, %v551
    %s555 = scalar_lea.vmem [#allocation2], 2
    %v556 = vld [vmem:[%s555] ss:$4 sm:$0xff]
    %558 = vrot.lane.b32.xlu0 %v556, 48
    %v559 = vpop.permute.xlu0 %558
    %vm561 = vcmask 589184
    %562 = vst.msk [vmem:[#allocation3] sm:$0xff] %vm561, %v559
    %s563 = scalar_lea.vmem [#allocation2], 3
    %v564 = vld [vmem:[%s563] ss:$4 sm:$0xff]
    %566 = vrot.lane.b32.xlu0 %v564, 72
    %v567 = vpop.permute.xlu0 %566
    %vm569 = vcmask 785984
    %570 = vst.msk [vmem:[#allocation3] sm:$0xff] %vm569, %v567
    %s571 = scalar_lea.vmem [#allocation2], 32
    %v572 = vld [vmem:[%s571] ss:$4 sm:$0xff]
    %573 = vst.msk [vmem:[#allocation3 + $0x8] sm:$0xff] %vm545, %v572
    %s574 = scalar_lea.vmem [#allocation2], 33
    %v575 = vld [vmem:[%s574] ss:$4 sm:$0xff]
    %577 = vrot.lane.b32.xlu0 %v575, 24
    %v578 = vpop.permute.xlu0 %577
    %580 = vst.msk [vmem:[#allocation3 + $0x8] sm:$0xff] %vm553, %v578
    %s581 = scalar_lea.vmem [#allocation2], 34
    %v582 = vld [vmem:[%s581] ss:$4 sm:$0xff]
    %584 = vrot.lane.b32.xlu0 %v582, 48
    %v585 = vpop.permute.xlu0 %584
    %587 = vst.msk [vmem:[#allocation3 + $0x8] sm:$0xff] %vm561, %v585
    %s588 = scalar_lea.vmem [#allocation2], 35
    %v589 = vld [vmem:[%s588] ss:$4 sm:$0xff]
    %591 = vrot.lane.b32.xlu0 %v589, 72
    %v592 = vpop.permute.xlu0 %591
    %594 = vst.msk [vmem:[#allocation3 + $0x8] sm:$0xff] %vm569, %v592
    %v595 = vld [vmem:[#allocation3] sm:$0xff]
    %v596 = vld [vmem:[#allocation3 + $0x8] sm:$0xff]
    %v597 = vld [vmem:[%s4] sm:$0xff]
    %v598 = vld [vmem:[%s4 + $0x8] sm:$0xff]
    %v599 = vld [vmem:[%s4 + $0x10] sm:$0xff]
    %v600 = vld [vmem:[%s4 + $0x18] sm:$0xff]
    %v601 = vld [vmem:[%s4 + $0x20] sm:$0xff]
    %v602 = vld [vmem:[%s4 + $0x28] sm:$0xff]
    %v603 = vld [vmem:[%s4 + $0x30] sm:$0xff]
    %v604 = vld [vmem:[%s4 + $0x38] sm:$0xff]
    %v605 = vld [vmem:[%s4 + $0x40] sm:$0xff]
    %v606 = vld [vmem:[%s4 + $0x48] sm:$0xff]
    %v607 = vld [vmem:[%s4 + $0x50] sm:$0xff]
    %v608 = vld [vmem:[%s4 + $0x58] sm:$0xff]
    %v609 = vld [vmem:[%s5] sm:$0x1]
    %v611 = vlaneseq
    %v612 = vshrl.u32 %v611, 7
    %v613 = vsub.s32 0, %v612
    %v614 = vrot.slane %v609, %v613
    %vm616 = vcmask 785408
    %v618 = vsel %vm616, %v595, 0
    %v621 = vsel %vm616, %v596, 0
    %623 = vmatprep.subr.mxu0 0.0
    %624 = vmatpush1.msra.mxu0 0.0
    %625 = vmatprep.subr.mxu0 0.0
    %626 = vmatpush1.msra.mxu0 0.0
    %627 = vmatprep.subr.mxu0 0.0
    %628 = vmatpush1.msra.mxu0 0.0
    %629 = vmatprep.subr.mxu0 0.0
    %630 = vmatpush1.msra.mxu0 0.0
    %631 = vmatprep.subr.mxu0 0.0
    %632 = vmatpush1.msra.mxu0 %v608
    %633 = vmatprep.subr.mxu0 0.0
    %634 = vmatpush1.msra.mxu0 %v607
    %635 = vmatprep.subr.mxu0 0.0
    %636 = vmatpush1.msra.mxu0 %v606
    %637 = vmatprep.subr.mxu0 0.0
    %638 = vmatpush1.msra.mxu0 %v605
    %639 = vmatprep.subr.mxu0 0.0
    %640 = vmatpush1.msra.mxu0 %v604
    %641 = vmatprep.subr.mxu0 0.0
    %642 = vmatpush1.msra.mxu0 %v603
    %643 = vmatprep.subr.mxu0 0.0
    %644 = vmatpush1.msra.mxu0 %v602
    %645 = vmatprep.subr.mxu0 0.0
    %646 = vmatpush1.msra.mxu0 %v601
    %647 = vmatprep.subr.mxu0 0.0
    %648 = vmatpush1.msra.mxu0 %v600
    %649 = vmatprep.subr.mxu0 0.0
    %650 = vmatpush1.msra.mxu0 %v599
    %651 = vmatprep.subr.mxu0 0.0
    %652 = vmatpush1.msra.mxu0 %v598
    %653 = vmatprep.subr.mxu0 0.0
    %654 = vmatpush1.msra.mxu0 %v597
    %655 = vmatprep.subr.mxu0 0.0
    %656 = vmatpush2.msra.mxu0 0.0
    %657 = vmatprep.subr.mxu0 0.0
    %658 = vmatpush2.msra.mxu0 0.0
    %659 = vmatprep.subr.mxu0 0.0
    %660 = vmatpush2.msra.mxu0 0.0
    %661 = vmatprep.subr.mxu0 0.0
    %662 = vmatpush2.msra.mxu0 0.0
    %663 = vmatprep.subr.mxu0 0.0
    %664 = vmatpush2.msra.mxu0 0.0
    %665 = vmatprep.subr.mxu0 0.0
    %666 = vmatpush2.msra.mxu0 0.0
    %667 = vmatprep.subr.mxu0 0.0
    %668 = vmatpush2.msra.mxu0 0.0
    %669 = vmatprep.subr.mxu0 0.0
    %670 = vmatpush2.msra.mxu0 0.0
    %671 = vmatprep.subr.mxu0 0.0
    %672 = vmatpush2.msra.mxu0 0.0
    %673 = vmatprep.subr.mxu0 0.0
    %674 = vmatpush2.msra.mxu0 0.0
    %675 = vmatprep.subr.mxu0 0.0
    %676 = vmatpush2.msra.mxu0 0.0
    %677 = vmatprep.subr.mxu0 0.0
    %678 = vmatpush2.msra.mxu0 0.0
    %679 = vmatprep.subr.mxu0 0.0
    %680 = vmatpush2.msra.mxu0 0.0
    %681 = vmatprep.subr.mxu0 0.0
    %682 = vmatpush2.msra.mxu0 0.0
    %683 = vmatprep.subr.mxu0 0.0
    %684 = vmatpush2.msra.mxu0 0.0
    %685 = vmatprep.subr.mxu0 0.0
    %686 = vmatpush2.msra.mxu0 0.0
    %687 = vmatprep.mubr.f32.mxu0 0.0
    %688 = vmatmul.mubr.f32.gmra.mxu0 %v618
    %v689 = vpop.f32.mrf.mxu0
    %v690 = vadd.f32 %v614, %v689
    %v691 = vpop.f32.mrf.mxu0
    %692 = vmatprep.mubr.f32.mxu0 0.0
    %693 = vmatmul.mubr.f32.gmra.mxu0 %v621
    %v694 = vpop.f32.mrf.mxu0
    %v695 = vadd.f32 %v614, %v694
    %v696 = vpop.f32.mrf.mxu0
    %697 = vdwg.mxu0
    %v698 = vtanh.pop %v690
    %v699 = vtanh.pop %v695
    %v700 = vmul.f32 %v698, %v698
    %v701 = vmul.f32 %v699, %v699
    %vm702 = vcmask 392192
    %703 = vst.msk [vmem:[#allocation4] sm:$0xff] %vm702, %v700
    %704 = vst.msk [vmem:[#allocation4 + $0x8] sm:$0xff] %vm702, %v701
    %v705 = vld [vmem:[#allocation4] ss:$2 sm:$0xf]
    %s706 = scalar_lea.vmem [#allocation4], 1
    %v707 = vld [vmem:[%s706] ss:$2 sm:$0xf]
    %v708 = vadd.f32 %v705, %v707
    %v709 = vrsqrt.pop %v708
    %v710 = vmul.f32 %v708, %v709
    %vm711 = vcmp.eq.f32.partialorder %v708, inf
    %v712 = vsel %vm711, %v708, %v710
    %vm713 = vcmp.eq.f32.partialorder %v708, 0.0
    %v714 = vand.u32 %v708, 2147483648
    %v715 = vsel %vm713, %v714, %v712
    %717 = vrot.lane.b32.xlu0 %v715, 112
    %v718 = vpop.permute.xlu0 %717
    %v720 = vadd.f32 %v715, %v718
    %721 = vrot.lane.b32.xlu0 %v715, 96
    %v722 = vpop.permute.xlu0 %721
    %v724 = vadd.f32 %v720, %v722
    %v725 = vmax.f32 %v724, 0.0
    %vm726 = vcmask 125952
    %727 = vst.msk [vmem:[#allocation5] sm:$0xf] %vm726, %v725
    %s728 = scalar_lea.vmem [#allocation4], 8
    %v729 = vld [vmem:[%s728] ss:$2 sm:$0xf]
    %s730 = scalar_lea.vmem [#allocation4], 9
    %v731 = vld [vmem:[%s730] ss:$2 sm:$0xf]
    %v732 = vadd.f32 %v729, %v731
    %v733 = vrsqrt.pop %v732
    %v734 = vmul.f32 %v732, %v733
    %vm735 = vcmp.eq.f32.partialorder %v732, inf
    %v736 = vsel %vm735, %v732, %v734
    %vm737 = vcmp.eq.f32.partialorder %v732, 0.0
    %v738 = vand.u32 %v732, 2147483648
    %v739 = vsel %vm737, %v738, %v736
    %741 = vrot.lane.b32.xlu0 %v739, 112
    %v742 = vpop.permute.xlu0 %741
    %v744 = vadd.f32 %v739, %v742
    %745 = vrot.lane.b32.xlu0 %v739, 96
    %v746 = vpop.permute.xlu0 %745
    %v748 = vadd.f32 %v744, %v746
    %v749 = vmax.f32 %v748, 0.0
    %750 = vst.msk [vmem:[#allocation5 + $0x4] sm:$0xf] %vm726, %v749
    // Predicated region
    $region26: #{tpu_custom_call.1} parent=1 // pred_check
      _
    $region27: #{tpu_custom_call.1} parent=1 // pred_check_branch
      %752 = sbr.rel (0) target = $region29
    $region28: #{tpu_custom_call.1} parent=1 // pred_region
      %s754 = ssub.s32 128, 128
      %755 = vsyncadd [#allocation6], %s754
      %s757 = sshll.u32 [#allocation5], 4
      %s758 = int_to_ptr.vmem [resolvable:$true] %s757
      %760 = dma.vmem_to_hbm [thread:$0]  %s758, 128, %s6, [#allocation6]
    $region29: #{tpu_custom_call.1} parent=1 // pred_fallthru
      _
    // Predicated region
    $region30: #{tpu_custom_call.1} parent=1 // pred_check
      _
    $region31: #{tpu_custom_call.1} parent=1 // pred_check_branch
      %762 = sbr.rel (0) target = $region33
    $region32: #{tpu_custom_call.1} parent=1 // pred_region
      %763 = dma.done [#allocation6], 128
    $region33: #{tpu_custom_call.1} parent=1 // pred_fallthru
      _
    %764 = vsyncpa [#allocation6], 1

</llo_original>
